<compile_context>
chip_gen: v7x
topology: tpu7x:2x2x1
jax: 0.10.0
libtpu: 0.0.40
codegen_flags: <defaults>
</compile_context>

<pallas_src>
import functools

import jax
import jax.numpy as jnp
from jax.experimental import pallas as pl
from jax.experimental.pallas import tpu as pltpu


def _round_up(x, m):
    return (x + m - 1) // m * m


def _const_spec(shape):
    """BlockSpec for a grid-invariant (parameter) block: resident, single-buffered."""
    try:
        return pl.BlockSpec(shape, lambda i: (0, 0), pipeline_mode=pl.Buffered(1))
    except (TypeError, ValueError):
        # Older Pallas without pipeline_mode support: fall back to default buffering.
        return pl.BlockSpec(shape, lambda i: (0, 0))


# ---------------------------------------------------------------------------
# Fused Pallas kernel: a stack of FC layers on one [TILE_N, *] row tile.
# refs = (x_ref, [w_ref(bf16), packed_params_ref(f32)] * L, out_ref)
# packed_params rows: 0 = bias, 1 = gamma, 2 = beta (rest zero padding).
# ---------------------------------------------------------------------------
def _fc_stack_kernel(*refs, layer_cfgs, eps):
    x_ref = refs[0]
    out_ref = refs[-1]
    prm = refs[1:-1]

    h = x_ref[...].astype(jnp.float32)  # [TILE_N, in_pad]
    for li, (with_ln, non_linear, true_out, pad_cols) in enumerate(layer_cfgs):
        w_ref = prm[2 * li]
        p_ref = prm[2 * li + 1]
        p = p_ref[...]                          # [8, dout_pad] f32
        bias = p[0:1, :]
        gamma = p[1:2, :]
        beta = p[2:3, :]

        # bf16 MXU matmul with f32 accumulation; bias add in f32 (VPU).
        y = jnp.dot(h.astype(jnp.bfloat16), w_ref[...],
                    preferred_element_type=jnp.float32)
        y = y + bias

        if with_ln:
            # LayerNorm statistics over the TRUE feature width, in f32.
            # Padded columns of y are exactly zero (zero-padded weights/bias), so
            # sum(y) is unaffected.  After centering, padded columns equal -mean;
            # subtract their exact contribution instead of masking.
            inv_d = jnp.float32(1.0 / true_out)
            mean = jnp.sum(y, axis=-1, keepdims=True) * inv_d
            yc = y - mean
            ss = jnp.sum(yc * yc, axis=-1, keepdims=True)
            if pad_cols:
                ss = ss - jnp.float32(pad_cols) * mean * mean
            var = jnp.maximum(ss * inv_d, 0.0)
            y = yc * jax.lax.rsqrt(var + eps)
            # gamma is zero-padded -> padded columns return to exactly 0.
            y = y * gamma + beta

        if non_linear:
            # LeakyReLU(0.2) == max(y, 0.2*y) for slope < 1 (saves a compare+select).
            y = jnp.maximum(y, jnp.float32(0.2) * y)

        h = y

    out_ref[...] = h.astype(out_ref.dtype)


# ---------------------------------------------------------------------------
# Parameter init mirroring the torch module's shapes.
#   Linear weights: kaiming_normal_(fan_in, relu) -> std = sqrt(2 / fan_in).
#   Linear biases: 0. LayerNorm: gamma = 1, beta = 0.
#   Weights stored already transposed as [in_dim, out_dim].
# ---------------------------------------------------------------------------
def init_fc_block_params(key, hidden_ch, num_hidden_layers, in_features,
                         out_features, outermost_linear=False, with_ln=True):
    dims = [(in_features, hidden_ch)]
    dims += [(hidden_ch, hidden_ch)] * num_hidden_layers
    dims += [(hidden_ch, out_features)]

    layers = []
    keys = jax.random.split(key, len(dims))
    for idx, ((din, dout), k) in enumerate(zip(dims, keys)):
        is_last = idx == len(dims) - 1
        layer_with_ln = with_ln and not (is_last and outermost_linear)
        layer_non_linear = not (is_last and outermost_linear)
        std = jnp.sqrt(2.0 / din)
        w = std * jax.random.normal(k, (din, dout), dtype=jnp.float32)
        b = jnp.zeros((1, dout), jnp.float32)
        gamma = jnp.ones((1, dout), jnp.float32)
        beta = jnp.zeros((1, dout), jnp.float32)
        layers.append(dict(w=w, b=b, gamma=gamma, beta=beta,
                           with_ln=layer_with_ln, non_linear=layer_non_linear))
    return layers


# ---------------------------------------------------------------------------
# One pallas_call over a group of layers whose parameters are VMEM-resident.
# ---------------------------------------------------------------------------
def _run_group(x_pad, layers, *, tile_n, eps, vmem_limit_bytes):
    n_pad, in_pad = x_pad.shape
    out_pad_dim = layers[-1]["w_pad"].shape[1]

    flat_args = [x_pad]
    in_specs = [pl.BlockSpec((tile_n, in_pad), lambda i: (i, 0))]
    layer_cfgs = []
    flops = 0
    param_bytes = 0
    n_ln = 0
    for layer in layers:
        w_p = layer["w_pad"]          # bf16 [din_p, dout_p]
        p_p = layer["p_pad"]          # f32  [8, dout_p]  (bias / gamma / beta)
        din_p, dout_p = w_p.shape
        flat_args += [w_p, p_p]
        # Grid-invariant blocks: DMA'd once, single-buffered, VMEM-resident.
        in_specs += [_const_spec((din_p, dout_p)),
                     _const_spec((8, dout_p))]
        layer_cfgs.append((layer["with_ln"], layer["non_linear"],
                           layer["true_out"], dout_p - layer["true_out"]))
        flops += 2 * n_pad * din_p * dout_p
        param_bytes += w_p.size * 2 + p_p.size * 4
        n_ln += int(layer["with_ln"])

    kernel = functools.partial(_fc_stack_kernel,
                               layer_cfgs=tuple(layer_cfgs), eps=eps)

    cost = pl.CostEstimate(
        flops=flops,
        transcendentals=n_pad * n_ln,  # one rsqrt per row per LN layer
        bytes_accessed=4 * n_pad * (in_pad + out_pad_dim) + param_bytes)

    return pl.pallas_call(
        kernel,
        out_shape=jax.ShapeDtypeStruct((n_pad, out_pad_dim), jnp.float32),
        grid=(n_pad // tile_n,),
        in_specs=in_specs,
        out_specs=pl.BlockSpec((tile_n, out_pad_dim), lambda i: (i, 0)),
        compiler_params=pltpu.CompilerParams(
            dimension_semantics=("parallel",),
            vmem_limit_bytes=vmem_limit_bytes),
        cost_estimate=cost,
    )(*flat_args)


# ---------------------------------------------------------------------------
# FCBlock forward: x [..., in_features] -> [..., out_features]
# ---------------------------------------------------------------------------
def fc_block_forward(params, x, *, tile_n_cap=1024, eps=1e-5):
    lead = x.shape[:-1]
    x2d = x.reshape((-1, x.shape[-1])).astype(jnp.float32)
    n, in_dim = x2d.shape
    out_dim = params[-1]["w"].shape[1]

    # --- pad & pack parameters: bf16 weights, packed f32 bias/gamma/beta ------
    packed = []
    for layer in params:
        w = layer["w"]
        din, dout = w.shape
        din_p, dout_p = _round_up(din, 128), _round_up(dout, 128)
        w_p = jnp.zeros((din_p, dout_p), jnp.bfloat16)
        w_p = w_p.at[:din, :dout].set(w.astype(jnp.bfloat16))
        p_p = jnp.zeros((8, dout_p), jnp.float32)
        p_p = p_p.at[0, :dout].set(layer["b"].reshape(-1))
        p_p = p_p.at[1, :dout].set(layer["gamma"].reshape(-1))  # pad gamma = 0
        p_p = p_p.at[2, :dout].set(layer["beta"].reshape(-1))
        packed.append(dict(w_pad=w_p, p_pad=p_p,
                           with_ln=bool(layer["with_ln"]),
                           non_linear=bool(layer["non_linear"]),
                           true_out=int(dout)))

    in_pad = _round_up(in_dim, 128)
    max_feat_pad = max([in_pad] + [l["w_pad"].shape[1] for l in packed])

    # --- generation-aware VMEM budget ----------------------------------------
    try:
        vmem_cap = int(pltpu.get_tpu_info().vmem_capacity_bytes)
    except Exception:
        vmem_cap = 64 * 1024 * 1024   # conservative default (v7x per-TC)
    vmem_budget = int(vmem_cap * 0.75)

    # --- row tile: big (amortize step overhead) but VMEM-safe, >= 2 steps -----
    def _tile_bytes(t):
        # 2x double-buffered f32 x/out tiles + ~6 activation temporaries.
        return 4 * t * max_feat_pad * (2 + 2 + 6)

    tile_n = min(tile_n_cap, max(_round_up(n, 8), 8))
    min_layer_bytes = min(l["w_pad"].size * 2 + l["p_pad"].size * 4 for l in packed)
    while tile_n > 8 and _tile_bytes(tile_n) + min_layer_bytes > vmem_budget:
        tile_n = max(8, _round_up(tile_n // 2, 8))
    # >= 2 grid steps so both v7x TensorCores get work under "parallel".
    while tile_n > 8 and _round_up(n, tile_n) // tile_n < 2:
        tile_n = max(8, _round_up(tile_n // 2, 8))
    n_pad = _round_up(n, tile_n)

    # --- split the layer stack into VMEM-resident groups (fallback) ----------
    param_budget = max(vmem_budget - _tile_bytes(tile_n), min_layer_bytes)
    groups, cur, cur_bytes = [], [], 0
    for layer in packed:
        lb = layer["w_pad"].size * 2 + layer["p_pad"].size * 4
        if cur and cur_bytes + lb > param_budget:
            groups.append(cur)
            cur, cur_bytes = [], 0
        cur.append(layer)
        cur_bytes += lb
    groups.append(cur)

    # --- input padding: skip the copy entirely when already aligned ----------
    if n_pad == n and in_pad == in_dim:
        h = x2d
    else:
        h = jnp.pad(x2d, ((0, n_pad - n), (0, in_pad - in_dim)))

    for group in groups:
        h = _run_group(h, group, tile_n=tile_n, eps=eps,
                       vmem_limit_bytes=vmem_budget)

    return h[:n, :out_dim].reshape(lead + (out_dim,))


# ---------------------------------------------------------------------------
# Pure-JAX references for sanity checks
# ---------------------------------------------------------------------------
def fc_block_reference(params, x, *, matmul_dtype=jnp.float32, eps=1e-5):
    lead = x.shape[:-1]
    h = x.reshape((-1, x.shape[-1])).astype(jnp.float32)
    for layer in params:
        y = jnp.dot(h.astype(matmul_dtype), layer["w"].astype(matmul_dtype),
                    preferred_element_type=jnp.float32) + layer["b"]
        if layer["with_ln"]:
            mean = jnp.mean(y, axis=-1, keepdims=True)
            var = jnp.mean(jnp.square(y - mean), axis=-1, keepdims=True)
            y = (y - mean) * jax.lax.rsqrt(var + eps)
            y = y * layer["gamma"] + layer["beta"]
        if layer["non_linear"]:
            y = jnp.where(y >= 0, y, 0.2 * y)
        h = y
    return h.reshape(lead + (h.shape[-1],))


if __name__ == "__main__":
    # Small shapes: batch=2, seq=8, in_features=16, hidden=32, out=8,
    # num_hidden_layers=2, outermost_linear=True.
    key = jax.random.PRNGKey(0)
    k_x, k_p = jax.random.split(key)

    batch, seq = 2, 8
    in_features, hidden_ch, out_features = 16, 32, 8
    num_hidden_layers = 2

    x = jax.random.normal(k_x, (batch, seq, in_features), dtype=jnp.float32)
    params = init_fc_block_params(
        k_p, hidden_ch, num_hidden_layers, in_features, out_features,
        outermost_linear=True, with_ln=True)

    out = jax.block_until_ready(fc_block_forward(params, x))
    assert out.shape == (batch, seq, out_features)

    # Tight check against a reference using the same bf16-operand / f32-accum
    # matmul precision as the kernel, plus a loose check against the pure-f32
    # reference (difference there is only bf16 weight/activation rounding).
    ref_bf16 = fc_block_reference(params, x, matmul_dtype=jnp.bfloat16)
    ref_f32 = fc_block_reference(params, x, matmul_dtype=jnp.float32)
    assert jnp.allclose(out, ref_bf16, atol=5e-3, rtol=5e-3), \
        "mismatch vs bf16-matmul reference"
    assert jnp.allclose(out, ref_f32, atol=2.5e-1, rtol=2.5e-1), \
        "mismatch vs f32 reference"

    print("KERNEL_OK")
</pallas_src>

<mosaic_0001>
module attributes {stable_mosaic.version = 11 : i64} {
  func.func @_fc_stack_kernel(%arg0: i32, %arg1: memref<8x128xf32, #tpu.memory_space<vmem>>, %arg2: memref<128x128xbf16, #tpu.memory_space<vmem>>, %arg3: memref<8x128xf32, #tpu.memory_space<vmem>>, %arg4: memref<128x128xbf16, #tpu.memory_space<vmem>>, %arg5: memref<8x128xf32, #tpu.memory_space<vmem>>, %arg6: memref<128x128xbf16, #tpu.memory_space<vmem>>, %arg7: memref<8x128xf32, #tpu.memory_space<vmem>>, %arg8: memref<128x128xbf16, #tpu.memory_space<vmem>>, %arg9: memref<8x128xf32, #tpu.memory_space<vmem>>, %arg10: memref<8x128xf32, #tpu.memory_space<vmem>>) attributes {dimension_semantics = [#tpu.dimension_semantics<parallel>], iteration_bounds = array<i64: 2>, scalar_prefetch = 0 : i64, scratch_operands = 0 : i64, tpu.core_type = #tpu.core_type<tc>, window_params = [{transform_indices = @transform_0, window_bounds = array<i64: 8, 128>}, {pipeline_mode = #tpu.pipeline_mode<synchronous>, transform_indices = @transform_1, window_bounds = array<i64: 128, 128>}, {pipeline_mode = #tpu.pipeline_mode<synchronous>, transform_indices = @transform_2, window_bounds = array<i64: 8, 128>}, {pipeline_mode = #tpu.pipeline_mode<synchronous>, transform_indices = @transform_3, window_bounds = array<i64: 128, 128>}, {pipeline_mode = #tpu.pipeline_mode<synchronous>, transform_indices = @transform_4, window_bounds = array<i64: 8, 128>}, {pipeline_mode = #tpu.pipeline_mode<synchronous>, transform_indices = @transform_5, window_bounds = array<i64: 128, 128>}, {pipeline_mode = #tpu.pipeline_mode<synchronous>, transform_indices = @transform_6, window_bounds = array<i64: 8, 128>}, {pipeline_mode = #tpu.pipeline_mode<synchronous>, transform_indices = @transform_7, window_bounds = array<i64: 128, 128>}, {pipeline_mode = #tpu.pipeline_mode<synchronous>, transform_indices = @transform_8, window_bounds = array<i64: 8, 128>}, {transform_indices = @transform_9, window_bounds = array<i64: 8, 128>}]} {
    %c0 = arith.constant 0 : index
    %c0_0 = arith.constant 0 : index
    %0 = vector.load %arg1[%c0, %c0_0] : memref<8x128xf32, #tpu.memory_space<vmem>>, vector<8x128xf32>
    %c0_1 = arith.constant 0 : index
    %c0_2 = arith.constant 0 : index
    %1 = vector.load %arg3[%c0_1, %c0_2] : memref<8x128xf32, #tpu.memory_space<vmem>>, vector<8x128xf32>
    %2 = vector.extract_strided_slice %1 {offsets = [0, 0], sizes = [1, 128], strides = [1, 1]} : vector<8x128xf32> to vector<1x128xf32>
    %3 = vector.extract_strided_slice %1 {offsets = [1, 0], sizes = [1, 128], strides = [1, 1]} : vector<8x128xf32> to vector<1x128xf32>
    %4 = vector.extract_strided_slice %1 {offsets = [2, 0], sizes = [1, 128], strides = [1, 1]} : vector<8x128xf32> to vector<1x128xf32>
    %5 = arith.truncf %0 : vector<8x128xf32> to vector<8x128xbf16>
    %c0_3 = arith.constant 0 : index
    %c0_4 = arith.constant 0 : index
    %6 = vector.load %arg2[%c0_3, %c0_4] : memref<128x128xbf16, #tpu.memory_space<vmem>>, vector<128x128xbf16>
    %cst = arith.constant dense<0.000000e+00> : vector<8x128xf32>
    %7 = tpu.matmul %5, %6, %cst {dimension_numbers = #tpu.dot_dimension_numbers<[1], [0], [0], [1], [0, 0, 1, 1], [], []>} : vector<8x128xbf16>, vector<128x128xbf16>, vector<8x128xf32> -> vector<8x128xf32>
    %8 = vector.broadcast %2 : vector<1x128xf32> to vector<8x128xf32>
    %9 = arith.addf %7, %8 : vector<8x128xf32>
    %cst_5 = arith.constant dense<0.000000e+00> : vector<8xf32>
    %10 = vector.multi_reduction <add>, %9, %cst_5 [1] : vector<8x128xf32> to vector<8xf32>
    %11 = vector.shape_cast %10 : vector<8xf32> to vector<8x1xf32>
    %cst_6 = arith.constant 3.125000e-02 : f32
    %12 = vector.broadcast %cst_6 : f32 to vector<8x1xf32>
    %13 = arith.mulf %11, %12 : vector<8x1xf32>
    %14 = vector.broadcast %13 : vector<8x1xf32> to vector<8x128xf32>
    %15 = arith.subf %9, %14 : vector<8x128xf32>
    %16 = arith.mulf %15, %15 : vector<8x128xf32>
    %cst_7 = arith.constant dense<0.000000e+00> : vector<8xf32>
    %17 = vector.multi_reduction <add>, %16, %cst_7 [1] : vector<8x128xf32> to vector<8xf32>
    %18 = vector.shape_cast %17 : vector<8xf32> to vector<8x1xf32>
    %cst_8 = arith.constant 9.600000e+01 : f32
    %19 = vector.broadcast %cst_8 : f32 to vector<8x1xf32>
    %20 = arith.mulf %19, %13 : vector<8x1xf32>
    %21 = arith.mulf %20, %13 : vector<8x1xf32>
    %22 = arith.subf %18, %21 : vector<8x1xf32>
    %cst_9 = arith.constant 3.125000e-02 : f32
    %23 = vector.broadcast %cst_9 : f32 to vector<8x1xf32>
    %24 = arith.mulf %22, %23 : vector<8x1xf32>
    %cst_10 = arith.constant 0.000000e+00 : f32
    %25 = vector.broadcast %cst_10 : f32 to vector<8x1xf32>
    %26 = arith.maximumf %24, %25 : vector<8x1xf32>
    %cst_11 = arith.constant 9.99999974E-6 : f32
    %27 = vector.broadcast %cst_11 : f32 to vector<8x1xf32>
    %28 = arith.addf %26, %27 : vector<8x1xf32>
    %29 = math.rsqrt %28 : vector<8x1xf32>
    %30 = vector.broadcast %29 : vector<8x1xf32> to vector<8x128xf32>
    %31 = arith.mulf %15, %30 : vector<8x128xf32>
    %32 = vector.broadcast %3 : vector<1x128xf32> to vector<8x128xf32>
    %33 = arith.mulf %31, %32 : vector<8x128xf32>
    %34 = vector.broadcast %4 : vector<1x128xf32> to vector<8x128xf32>
    %35 = arith.addf %33, %34 : vector<8x128xf32>
    %cst_12 = arith.constant 2.000000e-01 : f32
    %36 = vector.broadcast %cst_12 : f32 to vector<8x128xf32>
    %37 = arith.mulf %36, %35 : vector<8x128xf32>
    %38 = arith.maximumf %35, %37 : vector<8x128xf32>
    %c0_13 = arith.constant 0 : index
    %c0_14 = arith.constant 0 : index
    %39 = vector.load %arg5[%c0_13, %c0_14] : memref<8x128xf32, #tpu.memory_space<vmem>>, vector<8x128xf32>
    %40 = vector.extract_strided_slice %39 {offsets = [0, 0], sizes = [1, 128], strides = [1, 1]} : vector<8x128xf32> to vector<1x128xf32>
    %41 = vector.extract_strided_slice %39 {offsets = [1, 0], sizes = [1, 128], strides = [1, 1]} : vector<8x128xf32> to vector<1x128xf32>
    %42 = vector.extract_strided_slice %39 {offsets = [2, 0], sizes = [1, 128], strides = [1, 1]} : vector<8x128xf32> to vector<1x128xf32>
    %43 = arith.truncf %38 : vector<8x128xf32> to vector<8x128xbf16>
    %c0_15 = arith.constant 0 : index
    %c0_16 = arith.constant 0 : index
    %44 = vector.load %arg4[%c0_15, %c0_16] : memref<128x128xbf16, #tpu.memory_space<vmem>>, vector<128x128xbf16>
    %cst_17 = arith.constant dense<0.000000e+00> : vector<8x128xf32>
    %45 = tpu.matmul %43, %44, %cst_17 {dimension_numbers = #tpu.dot_dimension_numbers<[1], [0], [0], [1], [0, 0, 1, 1], [], []>} : vector<8x128xbf16>, vector<128x128xbf16>, vector<8x128xf32> -> vector<8x128xf32>
    %46 = vector.broadcast %40 : vector<1x128xf32> to vector<8x128xf32>
    %47 = arith.addf %45, %46 : vector<8x128xf32>
    %cst_18 = arith.constant dense<0.000000e+00> : vector<8xf32>
    %48 = vector.multi_reduction <add>, %47, %cst_18 [1] : vector<8x128xf32> to vector<8xf32>
    %49 = vector.shape_cast %48 : vector<8xf32> to vector<8x1xf32>
    %cst_19 = arith.constant 3.125000e-02 : f32
    %50 = vector.broadcast %cst_19 : f32 to vector<8x1xf32>
    %51 = arith.mulf %49, %50 : vector<8x1xf32>
    %52 = vector.broadcast %51 : vector<8x1xf32> to vector<8x128xf32>
    %53 = arith.subf %47, %52 : vector<8x128xf32>
    %54 = arith.mulf %53, %53 : vector<8x128xf32>
    %cst_20 = arith.constant dense<0.000000e+00> : vector<8xf32>
    %55 = vector.multi_reduction <add>, %54, %cst_20 [1] : vector<8x128xf32> to vector<8xf32>
    %56 = vector.shape_cast %55 : vector<8xf32> to vector<8x1xf32>
    %cst_21 = arith.constant 9.600000e+01 : f32
    %57 = vector.broadcast %cst_21 : f32 to vector<8x1xf32>
    %58 = arith.mulf %57, %51 : vector<8x1xf32>
    %59 = arith.mulf %58, %51 : vector<8x1xf32>
    %60 = arith.subf %56, %59 : vector<8x1xf32>
    %cst_22 = arith.constant 3.125000e-02 : f32
    %61 = vector.broadcast %cst_22 : f32 to vector<8x1xf32>
    %62 = arith.mulf %60, %61 : vector<8x1xf32>
    %cst_23 = arith.constant 0.000000e+00 : f32
    %63 = vector.broadcast %cst_23 : f32 to vector<8x1xf32>
    %64 = arith.maximumf %62, %63 : vector<8x1xf32>
    %cst_24 = arith.constant 9.99999974E-6 : f32
    %65 = vector.broadcast %cst_24 : f32 to vector<8x1xf32>
    %66 = arith.addf %64, %65 : vector<8x1xf32>
    %67 = math.rsqrt %66 : vector<8x1xf32>
    %68 = vector.broadcast %67 : vector<8x1xf32> to vector<8x128xf32>
    %69 = arith.mulf %53, %68 : vector<8x128xf32>
    %70 = vector.broadcast %41 : vector<1x128xf32> to vector<8x128xf32>
    %71 = arith.mulf %69, %70 : vector<8x128xf32>
    %72 = vector.broadcast %42 : vector<1x128xf32> to vector<8x128xf32>
    %73 = arith.addf %71, %72 : vector<8x128xf32>
    %cst_25 = arith.constant 2.000000e-01 : f32
    %74 = vector.broadcast %cst_25 : f32 to vector<8x128xf32>
    %75 = arith.mulf %74, %73 : vector<8x128xf32>
    %76 = arith.maximumf %73, %75 : vector<8x128xf32>
    %c0_26 = arith.constant 0 : index
    %c0_27 = arith.constant 0 : index
    %77 = vector.load %arg7[%c0_26, %c0_27] : memref<8x128xf32, #tpu.memory_space<vmem>>, vector<8x128xf32>
    %78 = vector.extract_strided_slice %77 {offsets = [0, 0], sizes = [1, 128], strides = [1, 1]} : vector<8x128xf32> to vector<1x128xf32>
    %79 = vector.extract_strided_slice %77 {offsets = [1, 0], sizes = [1, 128], strides = [1, 1]} : vector<8x128xf32> to vector<1x128xf32>
    %80 = vector.extract_strided_slice %77 {offsets = [2, 0], sizes = [1, 128], strides = [1, 1]} : vector<8x128xf32> to vector<1x128xf32>
    %81 = arith.truncf %76 : vector<8x128xf32> to vector<8x128xbf16>
    %c0_28 = arith.constant 0 : index
    %c0_29 = arith.constant 0 : index
    %82 = vector.load %arg6[%c0_28, %c0_29] : memref<128x128xbf16, #tpu.memory_space<vmem>>, vector<128x128xbf16>
    %cst_30 = arith.constant dense<0.000000e+00> : vector<8x128xf32>
    %83 = tpu.matmul %81, %82, %cst_30 {dimension_numbers = #tpu.dot_dimension_numbers<[1], [0], [0], [1], [0, 0, 1, 1], [], []>} : vector<8x128xbf16>, vector<128x128xbf16>, vector<8x128xf32> -> vector<8x128xf32>
    %84 = vector.broadcast %78 : vector<1x128xf32> to vector<8x128xf32>
    %85 = arith.addf %83, %84 : vector<8x128xf32>
    %cst_31 = arith.constant dense<0.000000e+00> : vector<8xf32>
    %86 = vector.multi_reduction <add>, %85, %cst_31 [1] : vector<8x128xf32> to vector<8xf32>
    %87 = vector.shape_cast %86 : vector<8xf32> to vector<8x1xf32>
    %cst_32 = arith.constant 3.125000e-02 : f32
    %88 = vector.broadcast %cst_32 : f32 to vector<8x1xf32>
    %89 = arith.mulf %87, %88 : vector<8x1xf32>
    %90 = vector.broadcast %89 : vector<8x1xf32> to vector<8x128xf32>
    %91 = arith.subf %85, %90 : vector<8x128xf32>
    %92 = arith.mulf %91, %91 : vector<8x128xf32>
    %cst_33 = arith.constant dense<0.000000e+00> : vector<8xf32>
    %93 = vector.multi_reduction <add>, %92, %cst_33 [1] : vector<8x128xf32> to vector<8xf32>
    %94 = vector.shape_cast %93 : vector<8xf32> to vector<8x1xf32>
    %cst_34 = arith.constant 9.600000e+01 : f32
    %95 = vector.broadcast %cst_34 : f32 to vector<8x1xf32>
    %96 = arith.mulf %95, %89 : vector<8x1xf32>
    %97 = arith.mulf %96, %89 : vector<8x1xf32>
    %98 = arith.subf %94, %97 : vector<8x1xf32>
    %cst_35 = arith.constant 3.125000e-02 : f32
    %99 = vector.broadcast %cst_35 : f32 to vector<8x1xf32>
    %100 = arith.mulf %98, %99 : vector<8x1xf32>
    %cst_36 = arith.constant 0.000000e+00 : f32
    %101 = vector.broadcast %cst_36 : f32 to vector<8x1xf32>
    %102 = arith.maximumf %100, %101 : vector<8x1xf32>
    %cst_37 = arith.constant 9.99999974E-6 : f32
    %103 = vector.broadcast %cst_37 : f32 to vector<8x1xf32>
    %104 = arith.addf %102, %103 : vector<8x1xf32>
    %105 = math.rsqrt %104 : vector<8x1xf32>
    %106 = vector.broadcast %105 : vector<8x1xf32> to vector<8x128xf32>
    %107 = arith.mulf %91, %106 : vector<8x128xf32>
    %108 = vector.broadcast %79 : vector<1x128xf32> to vector<8x128xf32>
    %109 = arith.mulf %107, %108 : vector<8x128xf32>
    %110 = vector.broadcast %80 : vector<1x128xf32> to vector<8x128xf32>
    %111 = arith.addf %109, %110 : vector<8x128xf32>
    %cst_38 = arith.constant 2.000000e-01 : f32
    %112 = vector.broadcast %cst_38 : f32 to vector<8x128xf32>
    %113 = arith.mulf %112, %111 : vector<8x128xf32>
    %114 = arith.maximumf %111, %113 : vector<8x128xf32>
    %c0_39 = arith.constant 0 : index
    %c0_40 = arith.constant 0 : index
    %115 = vector.load %arg9[%c0_39, %c0_40] : memref<8x128xf32, #tpu.memory_space<vmem>>, vector<8x128xf32>
    %116 = vector.extract_strided_slice %115 {offsets = [0, 0], sizes = [1, 128], strides = [1, 1]} : vector<8x128xf32> to vector<1x128xf32>
    %117 = arith.truncf %114 : vector<8x128xf32> to vector<8x128xbf16>
    %c0_41 = arith.constant 0 : index
    %c0_42 = arith.constant 0 : index
    %118 = vector.load %arg8[%c0_41, %c0_42] : memref<128x128xbf16, #tpu.memory_space<vmem>>, vector<128x128xbf16>
    %cst_43 = arith.constant dense<0.000000e+00> : vector<8x128xf32>
    %119 = tpu.matmul %117, %118, %cst_43 {dimension_numbers = #tpu.dot_dimension_numbers<[1], [0], [0], [1], [0, 0, 1, 1], [], []>} : vector<8x128xbf16>, vector<128x128xbf16>, vector<8x128xf32> -> vector<8x128xf32>
    %120 = vector.broadcast %116 : vector<1x128xf32> to vector<8x128xf32>
    %121 = arith.addf %119, %120 : vector<8x128xf32>
    %c0_44 = arith.constant 0 : index
    %c0_45 = arith.constant 0 : index
    %122 = vector.load %arg10[%c0_44, %c0_45] : memref<8x128xf32, #tpu.memory_space<vmem>>, vector<8x128xf32>
    tpu.vector_store %arg10[%c0_44, %c0_45], %121 {strides = array<i32>} : memref<8x128xf32, #tpu.memory_space<vmem>>, vector<8x128xf32>,
    return
  }
  func.func @transform_0(%arg0: i32) -> (i32, i32) {
    %c0_i32 = arith.constant 0 : i32
    %c0_i32_0 = arith.constant 0 : i32
    return %arg0, %c0_i32 : i32, i32
  }
  func.func @transform_1(%arg0: i32) -> (i32, i32) {
    %c0_i32 = arith.constant 0 : i32
    %c0_i32_0 = arith.constant 0 : i32
    %c0_i32_1 = arith.constant 0 : i32
    return %c0_i32, %c0_i32_0 : i32, i32
  }
  func.func @transform_2(%arg0: i32) -> (i32, i32) {
    %c0_i32 = arith.constant 0 : i32
    %c0_i32_0 = arith.constant 0 : i32
    %c0_i32_1 = arith.constant 0 : i32
    return %c0_i32, %c0_i32_0 : i32, i32
  }
  func.func @transform_3(%arg0: i32) -> (i32, i32) {
    %c0_i32 = arith.constant 0 : i32
    %c0_i32_0 = arith.constant 0 : i32
    %c0_i32_1 = arith.constant 0 : i32
    return %c0_i32, %c0_i32_0 : i32, i32
  }
  func.func @transform_4(%arg0: i32) -> (i32, i32) {
    %c0_i32 = arith.constant 0 : i32
    %c0_i32_0 = arith.constant 0 : i32
    %c0_i32_1 = arith.constant 0 : i32
    return %c0_i32, %c0_i32_0 : i32, i32
  }
  func.func @transform_5(%arg0: i32) -> (i32, i32) {
    %c0_i32 = arith.constant 0 : i32
    %c0_i32_0 = arith.constant 0 : i32
    %c0_i32_1 = arith.constant 0 : i32
    return %c0_i32, %c0_i32_0 : i32, i32
  }
  func.func @transform_6(%arg0: i32) -> (i32, i32) {
    %c0_i32 = arith.constant 0 : i32
    %c0_i32_0 = arith.constant 0 : i32
    %c0_i32_1 = arith.constant 0 : i32
    return %c0_i32, %c0_i32_0 : i32, i32
  }
  func.func @transform_7(%arg0: i32) -> (i32, i32) {
    %c0_i32 = arith.constant 0 : i32
    %c0_i32_0 = arith.constant 0 : i32
    %c0_i32_1 = arith.constant 0 : i32
    return %c0_i32, %c0_i32_0 : i32, i32
  }
  func.func @transform_8(%arg0: i32) -> (i32, i32) {
    %c0_i32 = arith.constant 0 : i32
    %c0_i32_0 = arith.constant 0 : i32
    %c0_i32_1 = arith.constant 0 : i32
    return %c0_i32, %c0_i32_0 : i32, i32
  }
  func.func @transform_9(%arg0: i32) -> (i32, i32) {
    %c0_i32 = arith.constant 0 : i32
    %c0_i32_0 = arith.constant 0 : i32
    return %arg0, %c0_i32 : i32, i32
  }
}

</mosaic_0001>

<llo_original>
// kernel: tpu_custom_call.1
$region0: #{tpu_custom_call.1}
  #allocation0 [shape = 'u32[]', space=smem, size = 0x4, offset = 0x4, fixed_abs, tag = 'smem constant byte address 0x4 - core index']
  #allocation1 [shape = 'u32[144,128]{1,0:T(1,128)}', space=vmem, size = 0x12000, scoped, tag = 'internal scratch']
  %s0 = inlined_call_operand.hbm [shape: f32[16,128], index: 0, kind: input, shape index: {}]
  %s1 = inlined_call_operand.hbm [shape: bf16[128,128], index: 1, kind: input, shape index: {}]
  %s2 = inlined_call_operand.hbm [shape: f32[8,128], index: 2, kind: input, shape index: {}]
  %s3 = inlined_call_operand.hbm [shape: bf16[128,128], index: 3, kind: input, shape index: {}]
  %s4 = inlined_call_operand.vmem [shape: f32[8,128], index: 4, kind: input, shape index: {}]
  %s5 = inlined_call_operand.hbm [shape: bf16[128,128], index: 5, kind: input, shape index: {}]
  %s6 = inlined_call_operand.vmem [shape: f32[8,128], index: 6, kind: input, shape index: {}]
  %s7 = inlined_call_operand.hbm [shape: bf16[128,128], index: 7, kind: input, shape index: {}]
  %s8 = inlined_call_operand.vmem [shape: f32[8,128], index: 8, kind: input, shape index: {}]
  %s9 = inlined_call_operand.hbm [shape: f32[16,128], index: 9, kind: output, shape index: {}]
  %s10 = sld [smem:[#allocation0]]
  $region93: #{tpu_custom_call.1} parent=0
    _
  %s12 = ssub.s32 1, %s10
  %s13 = scalar_select 0, %s12, %s10
  $region1: #{tpu_custom_call.1} parent=0
    #allocation2 [shape = 'u8[8192]{0}', space=vmem, size = 0x2000, scoped, tag = 'input window, operand 0']
    #allocation3 [shape = 's32[2]{0}', space=sflag, size = 0x8, scoped, tag = 'scoped memory for tpu_custom_call.1']
    #allocation4 [shape = 's32[2]{0}', space=sflag, size = 0x8, scoped, tag = 'scoped memory for tpu_custom_call.1']
    #allocation5 [shape = 'u8[32768]{0}', space=vmem, size = 0x8000, scoped, tag = 'input window, operand 1, single buffered']
    #allocation6 [shape = 's32[1]{0}', space=sflag, size = 0x4, scoped, tag = 'scoped memory for tpu_custom_call.1']
    #allocation7 [shape = 'u8[4096]{0}', space=vmem, size = 0x1000, scoped, tag = 'input window, operand 2, single buffered']
    #allocation8 [shape = 'u8[32768]{0}', space=vmem, size = 0x8000, scoped, tag = 'input window, operand 3, single buffered']
    #allocation9 [shape = 's32[1]{0}', space=sflag, size = 0x4, scoped, tag = 'scoped memory for tpu_custom_call.1']
    #allocation10 [shape = 'u8[32768]{0}', space=vmem, size = 0x8000, scoped, tag = 'input window, operand 5, single buffered']
    #allocation11 [shape = 'u8[32768]{0}', space=vmem, size = 0x8000, scoped, tag = 'input window, operand 7, single buffered']
    #allocation12 [shape = 's32[1]{0}', space=sflag, size = 0x4, scoped, tag = 'scoped memory for tpu_custom_call.1']
    #allocation13 [shape = 'u8[8192]{0}', space=vmem, size = 0x2000, scoped, tag = 'output window, operand 0']
    %14 = vsyncpa [#allocation3], 0
    %s15 = scalar_lea.sflag [#allocation3], 1
    %16 = vsyncpa %s15, 0
    %17 = vsyncpa [#allocation6], 0
    %18 = vsyncpa [#allocation9], 0
    %19 = vsyncpa [#allocation12], 0
    %20 = vsyncpa [#allocation4], 0
    %s21 = scalar_lea.sflag [#allocation4], 1
    %22 = vsyncpa %s21, 0
    loop: start=0, step=1, limit=4
    $region2: #{tpu_custom_call.1} parent=1 // loop_pre_header
      _
    $region3: #{tpu_custom_call.1} parent=1 // loop_header
      %s24 = sphi 0, %s28
      %p25 = scmp.ge.s32.totalorder %s24, 4
      %s34 = sphi 0, %s36
      %s37 = sphi 0, %s34
      %s38 = sphi 0, %s37
      %s54 = sphi 0, %s38
      %s58 = sphi 0, %s58
      %s60 = sphi 0, %s58
      %s61 = sphi 0, %s60
      %s75 = sphi 0, %s61
      %s79 = sphi 0, %s79
      %s81 = sphi 0, %s79
      %s82 = sphi 0, %s81
      %s96 = sphi 0, %s82
      %s100 = sphi 0, %s100
      %s102 = sphi 0, %s100
      %s103 = sphi 0, %s102
      %s117 = sphi 0, %s103
      %s121 = sphi 0, %s121
      %s123 = sphi 0, %s121
      %s124 = sphi 0, %s123
      %s138 = sphi 0, %s124
      %s142 = sphi 0, %s142
      %s144 = sphi 0, %s142
      %s145 = sphi 0, %s144
      %s159 = sphi 0, %s145
      %s163 = sphi 0, %s163
      %s165 = sphi 0, %s163
      %s166 = sphi 0, %s165
      %s180 = sphi 0, %s166
      %s184 = sphi 0, %s184
      %s186 = sphi 0, %s184
      %s187 = sphi 0, %s186
      %s201 = sphi 0, %s187
      %s205 = sphi 0, %s205
      %s207 = sphi 0, %s205
      %s208 = sphi 0, %s207
      %s222 = sphi 0, %s208
      %s228 = sphi 0, %s230
      %s231 = sphi 0, %s228
      %s232 = sphi 0, %s231
      %s248 = sphi 0, %s232
    $region4: #{tpu_custom_call.1} parent=1 // loop_header_branch
      %27 = sbr.rel (%p25) target = $region8
    $region5: #{tpu_custom_call.1} parent=1 // loop_body
      %s29 = ssub.s32 %s24, 1
      %s30 = ssub.s32 %s24, 2
      %s31 = sadd.s32 %s24, 1
      %s32 = ssub.s32 %s24, %s31
      %p33 = scmp.eq.s32.totalorder %s32, 0
      %s35 = sadd.s32 %s34, 1
      %s36 = scalar_select %p33, %s34, %s35
      %p39 = pneg %p33
      %p40 = scmp.eq.s32.totalorder %s24, 1
      %p41 = por %p39, %p40
      %p42 = scmp.ne.s32.totalorder %s34, %s37
      %p43 = scmp.eq.s32.totalorder %s24, 0
      %p44 = por %p42, %p43
      %p45 = scmp.ne.s32.totalorder %s34, %s37
      %p46 = scmp.eq.s32.totalorder %s29, 1
      %p47 = por %p45, %p46
      %p48 = scmp.ne.s32.totalorder %s37, %s38
      %p49 = scmp.eq.s32.totalorder %s29, 0
      %p50 = por %p48, %p49
      %p51 = scmp.ne.s32.totalorder %s37, %s38
      %p52 = scmp.eq.s32.totalorder %s30, 1
      %p53 = por %p51, %p52
      %p55 = scmp.ne.s32.totalorder %s38, %s54
      %p56 = scmp.eq.s32.totalorder %s30, 0
      %p57 = por %p55, %p56
      %s59 = sadd.s32 %s58, 1
      %p62 = scmp.eq.s32.totalorder %s24, 1
      %p63 = scmp.ne.s32.totalorder %s58, %s60
      %p64 = scmp.eq.s32.totalorder %s24, 0
      %p65 = por %p63, %p64
      %p66 = scmp.ne.s32.totalorder %s58, %s60
      %p67 = scmp.eq.s32.totalorder %s29, 1
      %p68 = por %p66, %p67
      %p69 = scmp.ne.s32.totalorder %s60, %s61
      %p70 = scmp.eq.s32.totalorder %s29, 0
      %p71 = por %p69, %p70
      %p72 = scmp.ne.s32.totalorder %s60, %s61
      %p73 = scmp.eq.s32.totalorder %s30, 1
      %p74 = por %p72, %p73
      %p76 = scmp.ne.s32.totalorder %s61, %s75
      %p77 = scmp.eq.s32.totalorder %s30, 0
      %p78 = por %p76, %p77
      %s80 = sadd.s32 %s79, 1
      %p83 = scmp.eq.s32.totalorder %s24, 1
      %p84 = scmp.ne.s32.totalorder %s79, %s81
      %p85 = scmp.eq.s32.totalorder %s24, 0
      %p86 = por %p84, %p85
      %p87 = scmp.ne.s32.totalorder %s79, %s81
      %p88 = scmp.eq.s32.totalorder %s29, 1
      %p89 = por %p87, %p88
      %p90 = scmp.ne.s32.totalorder %s81, %s82
      %p91 = scmp.eq.s32.totalorder %s29, 0
      %p92 = por %p90, %p91
      %p93 = scmp.ne.s32.totalorder %s81, %s82
      %p94 = scmp.eq.s32.totalorder %s30, 1
      %p95 = por %p93, %p94
      %p97 = scmp.ne.s32.totalorder %s82, %s96
      %p98 = scmp.eq.s32.totalorder %s30, 0
      %p99 = por %p97, %p98
      %s101 = sadd.s32 %s100, 1
      %p104 = scmp.eq.s32.totalorder %s24, 1
      %p105 = scmp.ne.s32.totalorder %s100, %s102
      %p106 = scmp.eq.s32.totalorder %s24, 0
      %p107 = por %p105, %p106
      %p108 = scmp.ne.s32.totalorder %s100, %s102
      %p109 = scmp.eq.s32.totalorder %s29, 1
      %p110 = por %p108, %p109
      %p111 = scmp.ne.s32.totalorder %s102, %s103
      %p112 = scmp.eq.s32.totalorder %s29, 0
      %p113 = por %p111, %p112
      %p114 = scmp.ne.s32.totalorder %s102, %s103
      %p115 = scmp.eq.s32.totalorder %s30, 1
      %p116 = por %p114, %p115
      %p118 = scmp.ne.s32.totalorder %s103, %s117
      %p119 = scmp.eq.s32.totalorder %s30, 0
      %p120 = por %p118, %p119
      %s122 = sadd.s32 %s121, 1
      %p125 = scmp.eq.s32.totalorder %s24, 1
      %p126 = scmp.ne.s32.totalorder %s121, %s123
      %p127 = scmp.eq.s32.totalorder %s24, 0
      %p128 = por %p126, %p127
      %p129 = scmp.ne.s32.totalorder %s121, %s123
      %p130 = scmp.eq.s32.totalorder %s29, 1
      %p131 = por %p129, %p130
      %p132 = scmp.ne.s32.totalorder %s123, %s124
      %p133 = scmp.eq.s32.totalorder %s29, 0
      %p134 = por %p132, %p133
      %p135 = scmp.ne.s32.totalorder %s123, %s124
      %p136 = scmp.eq.s32.totalorder %s30, 1
      %p137 = por %p135, %p136
      %p139 = scmp.ne.s32.totalorder %s124, %s138
      %p140 = scmp.eq.s32.totalorder %s30, 0
      %p141 = por %p139, %p140
      %s143 = sadd.s32 %s142, 1
      %p146 = scmp.eq.s32.totalorder %s24, 1
      %p147 = scmp.ne.s32.totalorder %s142, %s144
      %p148 = scmp.eq.s32.totalorder %s24, 0
      %p149 = por %p147, %p148
      %p150 = scmp.ne.s32.totalorder %s142, %s144
      %p151 = scmp.eq.s32.totalorder %s29, 1
      %p152 = por %p150, %p151
      %p153 = scmp.ne.s32.totalorder %s144, %s145
      %p154 = scmp.eq.s32.totalorder %s29, 0
      %p155 = por %p153, %p154
      %p156 = scmp.ne.s32.totalorder %s144, %s145
      %p157 = scmp.eq.s32.totalorder %s30, 1
      %p158 = por %p156, %p157
      %p160 = scmp.ne.s32.totalorder %s145, %s159
      %p161 = scmp.eq.s32.totalorder %s30, 0
      %p162 = por %p160, %p161
      %s164 = sadd.s32 %s163, 1
      %p167 = scmp.eq.s32.totalorder %s24, 1
      %p168 = scmp.ne.s32.totalorder %s163, %s165
      %p169 = scmp.eq.s32.totalorder %s24, 0
      %p170 = por %p168, %p169
      %p171 = scmp.ne.s32.totalorder %s163, %s165
      %p172 = scmp.eq.s32.totalorder %s29, 1
      %p173 = por %p171, %p172
      %p174 = scmp.ne.s32.totalorder %s165, %s166
      %p175 = scmp.eq.s32.totalorder %s29, 0
      %p176 = por %p174, %p175
      %p177 = scmp.ne.s32.totalorder %s165, %s166
      %p178 = scmp.eq.s32.totalorder %s30, 1
      %p179 = por %p177, %p178
      %p181 = scmp.ne.s32.totalorder %s166, %s180
      %p182 = scmp.eq.s32.totalorder %s30, 0
      %p183 = por %p181, %p182
      %s185 = sadd.s32 %s184, 1
      %p188 = scmp.eq.s32.totalorder %s24, 1
      %p189 = scmp.ne.s32.totalorder %s184, %s186
      %p190 = scmp.eq.s32.totalorder %s24, 0
      %p191 = por %p189, %p190
      %p192 = scmp.ne.s32.totalorder %s184, %s186
      %p193 = scmp.eq.s32.totalorder %s29, 1
      %p194 = por %p192, %p193
      %p195 = scmp.ne.s32.totalorder %s186, %s187
      %p196 = scmp.eq.s32.totalorder %s29, 0
      %p197 = por %p195, %p196
      %p198 = scmp.ne.s32.totalorder %s186, %s187
      %p199 = scmp.eq.s32.totalorder %s30, 1
      %p200 = por %p198, %p199
      %p202 = scmp.ne.s32.totalorder %s187, %s201
      %p203 = scmp.eq.s32.totalorder %s30, 0
      %p204 = por %p202, %p203
      %s206 = sadd.s32 %s205, 1
      %p209 = scmp.eq.s32.totalorder %s24, 1
      %p210 = scmp.ne.s32.totalorder %s205, %s207
      %p211 = scmp.eq.s32.totalorder %s24, 0
      %p212 = por %p210, %p211
      %p213 = scmp.ne.s32.totalorder %s205, %s207
      %p214 = scmp.eq.s32.totalorder %s29, 1
      %p215 = por %p213, %p214
      %p216 = scmp.ne.s32.totalorder %s207, %s208
      %p217 = scmp.eq.s32.totalorder %s29, 0
      %p218 = por %p216, %p217
      %p219 = scmp.ne.s32.totalorder %s207, %s208
      %p220 = scmp.eq.s32.totalorder %s30, 1
      %p221 = por %p219, %p220
      %p223 = scmp.ne.s32.totalorder %s208, %s222
      %p224 = scmp.eq.s32.totalorder %s30, 0
      %p225 = por %p223, %p224
      %s226 = ssub.s32 %s24, %s31
      %p227 = scmp.eq.s32.totalorder %s226, 0
      %s229 = sadd.s32 %s228, 1
      %s230 = scalar_select %p227, %s228, %s229
      %p233 = pneg %p227
      %p234 = scmp.eq.s32.totalorder %s24, 1
      %p235 = por %p233, %p234
      %p236 = scmp.ne.s32.totalorder %s228, %s231
      %p237 = scmp.eq.s32.totalorder %s24, 0
      %p238 = por %p236, %p237
      %p239 = scmp.ne.s32.totalorder %s228, %s231
      %p240 = scmp.eq.s32.totalorder %s29, 1
      %p241 = por %p239, %p240
      %p242 = scmp.ne.s32.totalorder %s231, %s232
      %p243 = scmp.eq.s32.totalorder %s29, 0
      %p244 = por %p242, %p243
      %p245 = scmp.ne.s32.totalorder %s231, %s232
      %p246 = scmp.eq.s32.totalorder %s30, 1
      %p247 = por %p245, %p246
      %p249 = scmp.ne.s32.totalorder %s232, %s248
      %p250 = scmp.eq.s32.totalorder %s30, 0
      %p251 = por %p249, %p250
      %p252 = scmp.le.s32.totalorder 1, %s24
      %p253 = scmp.lt.s32.totalorder %s24, 3
      %p254 = pnand %p252, %p253
      %p255 = pneg %p254
      // Predicated region
      $region9: #{tpu_custom_call.1} parent=5 // pred_check
        _
      $region10: #{tpu_custom_call.1} parent=5 // pred_check_branch
        %257 = sbr.rel (%p254) target = $region12
      $region11: #{tpu_custom_call.1} parent=5 // pred_region
        %s258 = ssub.s32 %s24, 1
        // Predicated region
        $region13: #{tpu_custom_call.1} parent=11 // pred_check
          %p259 = pneg %p71
        $region14: #{tpu_custom_call.1} parent=11 // pred_check_branch
          %261 = sbr.rel (%p259) target = $region16
        $region15: #{tpu_custom_call.1} parent=11 // pred_region
          %s263 = ssub.s32 1024, 1024
          %264 = vsyncadd [#allocation6], %s263
          %s265 = sshll.u32 [#allocation5], 4
          %s266 = int_to_ptr.vmem [resolvable:$true] %s265
          %271 = dma.hbm_to_vmem [thread:$0]  %s1, 1024, %s266, [#allocation6], 64, 64, 4
        $region16: #{tpu_custom_call.1} parent=11 // pred_fallthru
          _
        // Predicated region
        $region17: #{tpu_custom_call.1} parent=11 // pred_check
          %p272 = pneg %p92
        $region18: #{tpu_custom_call.1} parent=11 // pred_check_branch
          %274 = sbr.rel (%p272) target = $region20
        $region19: #{tpu_custom_call.1} parent=11 // pred_region
          %s276 = ssub.s32 128, 128
          %277 = vsyncadd [#allocation6], %s276
          %s279 = sshll.u32 [#allocation7], 4
          %s280 = int_to_ptr.vmem [resolvable:$true] %s279
          %282 = dma.hbm_to_vmem [thread:$0]  %s2, 128, %s280, [#allocation6]
        $region20: #{tpu_custom_call.1} parent=11 // pred_fallthru
          _
        // Predicated region
        $region21: #{tpu_custom_call.1} parent=11 // pred_check
          %p283 = pneg %p113
        $region22: #{tpu_custom_call.1} parent=11 // pred_check_branch
          %285 = sbr.rel (%p283) target = $region24
        $region23: #{tpu_custom_call.1} parent=11 // pred_region
          %s287 = ssub.s32 1024, 1024
          %288 = vsyncadd [#allocation9], %s287
          %s289 = sshll.u32 [#allocation8], 4
          %s290 = int_to_ptr.vmem [resolvable:$true] %s289
          %295 = dma.hbm_to_vmem [thread:$0]  %s3, 1024, %s290, [#allocation9], 64, 64, 4
        $region24: #{tpu_custom_call.1} parent=11 // pred_fallthru
          _
        // Predicated region
        $region25: #{tpu_custom_call.1} parent=11 // pred_check
          %p296 = pneg %p134
        $region26: #{tpu_custom_call.1} parent=11 // pred_check_branch
          %298 = sbr.rel (%p296) target = $region28
        $region27: #{tpu_custom_call.1} parent=11 // pred_region
          _
        $region28: #{tpu_custom_call.1} parent=11 // pred_fallthru
          _
        // Predicated region
        $region29: #{tpu_custom_call.1} parent=11 // pred_check
          %p299 = pneg %p155
        $region30: #{tpu_custom_call.1} parent=11 // pred_check_branch
          %301 = sbr.rel (%p299) target = $region32
        $region31: #{tpu_custom_call.1} parent=11 // pred_region
          %s303 = ssub.s32 1024, 1024
          %304 = vsyncadd [#allocation9], %s303
          %s305 = sshll.u32 [#allocation10], 4
          %s306 = int_to_ptr.vmem [resolvable:$true] %s305
          %311 = dma.hbm_to_vmem [thread:$0]  %s5, 1024, %s306, [#allocation9], 64, 64, 4
        $region32: #{tpu_custom_call.1} parent=11 // pred_fallthru
          _
        // Predicated region
        $region33: #{tpu_custom_call.1} parent=11 // pred_check
          %p312 = pneg %p176
        $region34: #{tpu_custom_call.1} parent=11 // pred_check_branch
          %314 = sbr.rel (%p312) target = $region36
        $region35: #{tpu_custom_call.1} parent=11 // pred_region
          _
        $region36: #{tpu_custom_call.1} parent=11 // pred_fallthru
          _
        // Predicated region
        $region37: #{tpu_custom_call.1} parent=11 // pred_check
          %p315 = pneg %p197
        $region38: #{tpu_custom_call.1} parent=11 // pred_check_branch
          %317 = sbr.rel (%p315) target = $region40
        $region39: #{tpu_custom_call.1} parent=11 // pred_region
          %s319 = ssub.s32 1024, 1024
          %320 = vsyncadd [#allocation12], %s319
          %s321 = sshll.u32 [#allocation11], 4
          %s322 = int_to_ptr.vmem [resolvable:$true] %s321
          %327 = dma.hbm_to_vmem [thread:$0]  %s7, 1024, %s322, [#allocation12], 64, 64, 4
        $region40: #{tpu_custom_call.1} parent=11 // pred_fallthru
          _
        // Predicated region
        $region41: #{tpu_custom_call.1} parent=11 // pred_check
          %p328 = pneg %p218
        $region42: #{tpu_custom_call.1} parent=11 // pred_check_branch
          %330 = sbr.rel (%p328) target = $region44
        $region43: #{tpu_custom_call.1} parent=11 // pred_region
          _
        $region44: #{tpu_custom_call.1} parent=11 // pred_fallthru
          _
      $region12: #{tpu_custom_call.1} parent=5 // pred_fallthru
        _
      %p331 = scmp.lt.s32.totalorder %s24, 2
      // Predicated region
      $region45: #{tpu_custom_call.1} parent=5 // pred_check
        %p332 = pneg %p331
      $region46: #{tpu_custom_call.1} parent=5 // pred_check_branch
        %334 = sbr.rel (%p332) target = $region48
      $region47: #{tpu_custom_call.1} parent=5 // pred_region
        // Predicated region
        $region49: #{tpu_custom_call.1} parent=47 // pred_check
          %p335 = pneg %p44
        $region50: #{tpu_custom_call.1} parent=47 // pred_check_branch
          %337 = sbr.rel (%p335) target = $region52
        $region51: #{tpu_custom_call.1} parent=47 // pred_region
          %s338 = sand.u32 %s34, 1
          %s339 = scalar_lea.sflag [#allocation3], %s338
          %s340 = sand.u32 %s34, 1
          %s341 = smul.addr %s340, 8
          %s342 = scalar_lea.vmem [#allocation2], %s341
          %s344 = ssub.s32 128, 128
          %345 = vsyncadd %s339, %s344
          %s346 = smul.addr %s24, 128
          %s347 = scalar_lea.hbm %s0, %s346
          %s349 = sshll.u32 %s342, 4
          %s350 = int_to_ptr.vmem [resolvable:$true] %s349
          %352 = dma.hbm_to_vmem [thread:$0]  %s347, 128, %s350, %s339
        $region52: #{tpu_custom_call.1} parent=47 // pred_fallthru
          _
      $region48: #{tpu_custom_call.1} parent=5 // pred_fallthru
        _
      %p353 = scmp.le.s32.totalorder 1, %s24
      %p354 = scmp.lt.s32.totalorder %s24, 3
      %p355 = pnand %p353, %p354
      %p356 = pneg %p355
      // Predicated region
      $region53: #{tpu_custom_call.1} parent=5 // pred_check
        _
      $region54: #{tpu_custom_call.1} parent=5 // pred_check_branch
        %358 = sbr.rel (%p355) target = $region56
      $region55: #{tpu_custom_call.1} parent=5 // pred_region
        %s359 = ssub.s32 %s24, 1
        %s360 = sand.u32 %s37, 1
        %s361 = scalar_lea.sflag [#allocation3], %s360
        %s362 = sand.u32 %s37, 1
        %s363 = smul.addr %s362, 8
        %s364 = scalar_lea.vmem [#allocation2], %s363
        // Predicated region
        $region57: #{tpu_custom_call.1} parent=55 // pred_check
          %p365 = pneg %p50
        $region58: #{tpu_custom_call.1} parent=55 // pred_check_branch
          %367 = sbr.rel (%p365) target = $region60
        $region59: #{tpu_custom_call.1} parent=55 // pred_region
          %368 = dma.done %s361, 128
        $region60: #{tpu_custom_call.1} parent=55 // pred_fallthru
          _
        // Predicated region
        $region61: #{tpu_custom_call.1} parent=55 // pred_check
          %p369 = pneg %p71
        $region62: #{tpu_custom_call.1} parent=55 // pred_check_branch
          %371 = sbr.rel (%p369) target = $region64
        $region63: #{tpu_custom_call.1} parent=55 // pred_region
          %372 = dma.done [#allocation6], 1024
        $region64: #{tpu_custom_call.1} parent=55 // pred_fallthru
          _
        // Predicated region
        $region65: #{tpu_custom_call.1} parent=55 // pred_check
          %p373 = pneg %p92
        $region66: #{tpu_custom_call.1} parent=55 // pred_check_branch
          %375 = sbr.rel (%p373) target = $region68
        $region67: #{tpu_custom_call.1} parent=55 // pred_region
          %376 = dma.done [#allocation6], 128
        $region68: #{tpu_custom_call.1} parent=55 // pred_fallthru
          _
        // Predicated region
        $region69: #{tpu_custom_call.1} parent=55 // pred_check
          %p377 = pneg %p113
        $region70: #{tpu_custom_call.1} parent=55 // pred_check_branch
          %379 = sbr.rel (%p377) target = $region72
        $region71: #{tpu_custom_call.1} parent=55 // pred_region
          %380 = dma.done [#allocation9], 1024
        $region72: #{tpu_custom_call.1} parent=55 // pred_fallthru
          _
        // Predicated region
        $region73: #{tpu_custom_call.1} parent=55 // pred_check
          %p381 = pneg %p155
        $region74: #{tpu_custom_call.1} parent=55 // pred_check_branch
          %383 = sbr.rel (%p381) target = $region76
        $region75: #{tpu_custom_call.1} parent=55 // pred_region
          %384 = dma.done [#allocation9], 1024
        $region76: #{tpu_custom_call.1} parent=55 // pred_fallthru
          _
        // Predicated region
        $region77: #{tpu_custom_call.1} parent=55 // pred_check
          %p385 = pneg %p197
        $region78: #{tpu_custom_call.1} parent=55 // pred_check_branch
          %387 = sbr.rel (%p385) target = $region80
        $region79: #{tpu_custom_call.1} parent=55 // pred_region
          %388 = dma.done [#allocation12], 1024
        $region80: #{tpu_custom_call.1} parent=55 // pred_fallthru
          _
        %s389 = sand.u32 %s37, 1
        %s390 = scalar_lea.sflag [#allocation3], %s389
        %s391 = sand.u32 %s37, 1
        %s392 = smul.addr %s391, 8
        %s393 = scalar_lea.vmem [#allocation2], %s392
        %p394 = pneg %p50
        %p395 = pneg %p47
        %p396 = pneg %p71
        %p397 = pneg %p68
        %p398 = pneg %p92
        %p399 = pneg %p89
        %p400 = pneg %p113
        %p401 = pneg %p110
        %p402 = pneg %p134
        %p403 = pneg %p131
        %p404 = pneg %p155
        %p405 = pneg %p152
        %p406 = pneg %p176
        %p407 = pneg %p173
        %p408 = pneg %p197
        %p409 = pneg %p194
        %p410 = pneg %p218
        %p411 = pneg %p215
        %p412 = pneg %p244
        %p413 = pneg %p241
        %s414 = sand.u32 %s231, 1
        %s415 = scalar_lea.sflag [#allocation4], %s414
        %s416 = sand.u32 %s231, 1
        %s417 = smul.addr %s416, 8
        %s418 = scalar_lea.vmem [#allocation13], %s417
        %v420 = vld [vmem:[%s364] sm:$0xff]
        %v421 = vld [vmem:[#allocation7] sm:$0xff]
        %v422 = vpack.c.bf16 %v420, %v420
        %v423 = vld [vmem:[#allocation5] sm:$0xf]
        %v424 = vld [vmem:[#allocation5 + $0x4] sm:$0xf]
        %v425 = vld [vmem:[#allocation5 + $0x8] sm:$0xf]
        %v426 = vld [vmem:[#allocation5 + $0xc] sm:$0xf]
        %v427 = vld [vmem:[#allocation5 + $0x10] sm:$0xf]
        %v428 = vld [vmem:[#allocation5 + $0x14] sm:$0xf]
        %v429 = vld [vmem:[#allocation5 + $0x18] sm:$0xf]
        %v430 = vld [vmem:[#allocation5 + $0x1c] sm:$0xf]
        %v431 = vld [vmem:[#allocation5 + $0x20] sm:$0xf]
        %v432 = vld [vmem:[#allocation5 + $0x24] sm:$0xf]
        %v433 = vld [vmem:[#allocation5 + $0x28] sm:$0xf]
        %v434 = vld [vmem:[#allocation5 + $0x2c] sm:$0xf]
        %v435 = vld [vmem:[#allocation5 + $0x30] sm:$0xf]
        %v436 = vld [vmem:[#allocation5 + $0x34] sm:$0xf]
        %v437 = vld [vmem:[#allocation5 + $0x38] sm:$0xf]
        %v438 = vld [vmem:[#allocation5 + $0x3c] sm:$0xf]
        %v439 = vlaneseq
        %v440 = vshrl.u32 %v439, 7
        %v441 = vsub.s32 0, %v440
        %v442 = vrot.slane %v421, %v441
        %v459 = vunpack.c.l.b16 %v423
        %v460 = vunpack.c.l.b16 %v424
        %v461 = vunpack.c.l.b16 %v425
        %v462 = vunpack.c.l.b16 %v426
        %v463 = vunpack.c.l.b16 %v427
        %v464 = vunpack.c.l.b16 %v428
        %v465 = vunpack.c.l.b16 %v429
        %v466 = vunpack.c.l.b16 %v430
        %v467 = vunpack.c.l.b16 %v431
        %v468 = vunpack.c.l.b16 %v432
        %v469 = vunpack.c.l.b16 %v433
        %v470 = vunpack.c.l.b16 %v434
        %v471 = vunpack.c.l.b16 %v435
        %v472 = vunpack.c.l.b16 %v436
        %v473 = vunpack.c.l.b16 %v437
        %v474 = vunpack.c.l.b16 %v438
        %v475 = vpack.c.b16 %v460, %v459
        %v476 = vpack.c.b16 %v462, %v461
        %v477 = vpack.c.b16 %v464, %v463
        %v478 = vpack.c.b16 %v466, %v465
        %v479 = vpack.c.b16 %v468, %v467
        %v480 = vpack.c.b16 %v470, %v469
        %v481 = vpack.c.b16 %v472, %v471
        %v482 = vpack.c.b16 %v474, %v473
        %491 = vmatprep.subr.bf16.mxu0 0
        %492 = vmatpush1.bf16.msra.mxu0 %v475
        %493 = vmatprep.subr.bf16.mxu0 0
        %494 = vmatpush1.bf16.msra.mxu0 %v476
        %495 = vmatprep.subr.bf16.mxu0 0
        %496 = vmatpush1.bf16.msra.mxu0 %v477
        %497 = vmatprep.subr.bf16.mxu0 0
        %498 = vmatpush1.bf16.msra.mxu0 %v478
        %499 = vmatprep.subr.bf16.mxu0 0
        %500 = vmatpush1.bf16.msra.mxu0 %v479
        %501 = vmatprep.subr.bf16.mxu0 0
        %502 = vmatpush1.bf16.msra.mxu0 %v480
        %503 = vmatprep.subr.bf16.mxu0 0
        %504 = vmatpush1.bf16.msra.mxu0 %v481
        %505 = vmatprep.subr.bf16.mxu0 0
        %506 = vmatpush1.bf16.msra.mxu0 %v482
        %507 = vmatprep.subr.bf16.mxu0 0
        %508 = vmatpush1.bf16.msra.mxu0 0
        %509 = vmatprep.subr.bf16.mxu0 0
        %510 = vmatpush1.bf16.msra.mxu0 0
        %511 = vmatprep.subr.bf16.mxu0 0
        %512 = vmatpush1.bf16.msra.mxu0 0
        %513 = vmatprep.subr.bf16.mxu0 0
        %514 = vmatpush1.bf16.msra.mxu0 0
        %515 = vmatprep.subr.bf16.mxu0 0
        %516 = vmatpush1.bf16.msra.mxu0 0
        %517 = vmatprep.subr.bf16.mxu0 0
        %518 = vmatpush1.bf16.msra.mxu0 0
        %519 = vmatprep.subr.bf16.mxu0 0
        %520 = vmatpush1.bf16.msra.mxu0 0
        %521 = vmatprep.subr.bf16.mxu0 0
        %522 = vmatpush1.bf16.msra.mxu0 0
        %523 = vmatprep.mubr.bf16.mxu0 0
        %524 = vmatmul.mubr.bf16.gmra.mrb[0].mxu0 %v422
        %v525 = vpop.f32.mrb[0].mxu0
        %v526 = vadd.f32 %v442, %v525
        %v527 = vpop.f32.mrb[0].mxu0
        %v528 = vpop.f32.mrb[0].mxu0
        %v529 = vpop.f32.mrb[0].mxu0
        %530 = vdwg.mxu0
        %531 = vadd.xlane.f32.xlu0 %v526
        %v532 = vpop.xlane.xlu0 %531
        %v533 = vmul.f32 %v532, 0.03125
        %v534 = vsub.f32 %v526, %v533
        %v535 = vmul.f32 %v534, %v534
        %536 = vadd.xlane.f32.xlu0 %v535
        %v537 = vpop.xlane.xlu0 %536
        %v538 = vmul.f32 %v533, 96.0
        %v539 = vmul.f32 %v538, %v533
        %v540 = vsub.f32 %v537, %v539
        %v541 = vmul.f32 %v540, 0.03125
        %v542 = vmax.f32 %v541, 0.0
        %v543 = vadd.f32 %v542, 1e-05
        %v544 = vrsqrt.pop %v543
        %v545 = vmul.f32 %v534, %v544
        %v546 = vlaneseq
        %v547 = vshrl.u32 %v546, 7
        %v548 = vsub.s32 1, %v547
        %v549 = vrot.slane %v421, %v548
        %v550 = vmul.f32 %v545, %v549
        %v551 = vlaneseq
        %v552 = vshrl.u32 %v551, 7
        %v553 = vsub.s32 2, %v552
        %v554 = vrot.slane %v421, %v553
        %v555 = vadd.f32 %v550, %v554
        %v556 = vmul.f32 %v555, 0.2
        %v557 = vmax.f32 %v555, %v556
        %v558 = vld [vmem:[%s4] sm:$0xff]
        %v559 = vpack.c.bf16 %v557, %v557
        %v560 = vld [vmem:[#allocation8] sm:$0xf]
        %v561 = vld [vmem:[#allocation8 + $0x4] sm:$0xf]
        %v562 = vld [vmem:[#allocation8 + $0x8] sm:$0xf]
        %v563 = vld [vmem:[#allocation8 + $0xc] sm:$0xf]
        %v564 = vld [vmem:[#allocation8 + $0x10] sm:$0xf]
        %v565 = vld [vmem:[#allocation8 + $0x14] sm:$0xf]
        %v566 = vld [vmem:[#allocation8 + $0x18] sm:$0xf]
        %v567 = vld [vmem:[#allocation8 + $0x1c] sm:$0xf]
        %v568 = vld [vmem:[#allocation8 + $0x20] sm:$0xf]
        %v569 = vld [vmem:[#allocation8 + $0x24] sm:$0xf]
        %v570 = vld [vmem:[#allocation8 + $0x28] sm:$0xf]
        %v571 = vld [vmem:[#allocation8 + $0x2c] sm:$0xf]
        %v572 = vld [vmem:[#allocation8 + $0x30] sm:$0xf]
        %v573 = vld [vmem:[#allocation8 + $0x34] sm:$0xf]
        %v574 = vld [vmem:[#allocation8 + $0x38] sm:$0xf]
        %v575 = vld [vmem:[#allocation8 + $0x3c] sm:$0xf]
        %v576 = vlaneseq
        %v577 = vshrl.u32 %v576, 7
        %v578 = vsub.s32 0, %v577
        %v579 = vrot.slane %v558, %v578
        %v596 = vunpack.c.l.b16 %v560
        %v597 = vunpack.c.l.b16 %v561
        %v598 = vunpack.c.l.b16 %v562
        %v599 = vunpack.c.l.b16 %v563
        %v600 = vunpack.c.l.b16 %v564
        %v601 = vunpack.c.l.b16 %v565
        %v602 = vunpack.c.l.b16 %v566
        %v603 = vunpack.c.l.b16 %v567
        %v604 = vunpack.c.l.b16 %v568
        %v605 = vunpack.c.l.b16 %v569
        %v606 = vunpack.c.l.b16 %v570
        %v607 = vunpack.c.l.b16 %v571
        %v608 = vunpack.c.l.b16 %v572
        %v609 = vunpack.c.l.b16 %v573
        %v610 = vunpack.c.l.b16 %v574
        %v611 = vunpack.c.l.b16 %v575
        %v612 = vpack.c.b16 %v597, %v596
        %v613 = vpack.c.b16 %v599, %v598
        %v614 = vpack.c.b16 %v601, %v600
        %v615 = vpack.c.b16 %v603, %v602
        %v616 = vpack.c.b16 %v605, %v604
        %v617 = vpack.c.b16 %v607, %v606
        %v618 = vpack.c.b16 %v609, %v608
        %v619 = vpack.c.b16 %v611, %v610
        %628 = vmatprep.subr.bf16.mxu0 0
        %629 = vmatpush1.bf16.msra.mxu0 %v612
        %630 = vmatprep.subr.bf16.mxu0 0
        %631 = vmatpush1.bf16.msra.mxu0 %v613
        %632 = vmatprep.subr.bf16.mxu0 0
        %633 = vmatpush1.bf16.msra.mxu0 %v614
        %634 = vmatprep.subr.bf16.mxu0 0
        %635 = vmatpush1.bf16.msra.mxu0 %v615
        %636 = vmatprep.subr.bf16.mxu0 0
        %637 = vmatpush1.bf16.msra.mxu0 %v616
        %638 = vmatprep.subr.bf16.mxu0 0
        %639 = vmatpush1.bf16.msra.mxu0 %v617
        %640 = vmatprep.subr.bf16.mxu0 0
        %641 = vmatpush1.bf16.msra.mxu0 %v618
        %642 = vmatprep.subr.bf16.mxu0 0
        %643 = vmatpush1.bf16.msra.mxu0 %v619
        %644 = vmatprep.subr.bf16.mxu0 0
        %645 = vmatpush1.bf16.msra.mxu0 0
        %646 = vmatprep.subr.bf16.mxu0 0
        %647 = vmatpush1.bf16.msra.mxu0 0
        %648 = vmatprep.subr.bf16.mxu0 0
        %649 = vmatpush1.bf16.msra.mxu0 0
        %650 = vmatprep.subr.bf16.mxu0 0
        %651 = vmatpush1.bf16.msra.mxu0 0
        %652 = vmatprep.subr.bf16.mxu0 0
        %653 = vmatpush1.bf16.msra.mxu0 0
        %654 = vmatprep.subr.bf16.mxu0 0
        %655 = vmatpush1.bf16.msra.mxu0 0
        %656 = vmatprep.subr.bf16.mxu0 0
        %657 = vmatpush1.bf16.msra.mxu0 0
        %658 = vmatprep.subr.bf16.mxu0 0
        %659 = vmatpush1.bf16.msra.mxu0 0
        %660 = vmatprep.mubr.bf16.mxu0 0
        %661 = vmatmul.mubr.bf16.gmra.mrb[0].mxu0 %v559
        %v662 = vpop.f32.mrb[0].mxu0
        %v663 = vadd.f32 %v579, %v662
        %v664 = vpop.f32.mrb[0].mxu0
        %v665 = vpop.f32.mrb[0].mxu0
        %v666 = vpop.f32.mrb[0].mxu0
        %667 = vdwg.mxu0
        %668 = vadd.xlane.f32.xlu0 %v663
        %v669 = vpop.xlane.xlu0 %668
        %v670 = vmul.f32 %v669, 0.03125
        %v671 = vsub.f32 %v663, %v670
        %v672 = vmul.f32 %v671, %v671
        %673 = vadd.xlane.f32.xlu0 %v672
        %v674 = vpop.xlane.xlu0 %673
        %v675 = vmul.f32 %v670, 96.0
        %v676 = vmul.f32 %v675, %v670
        %v677 = vsub.f32 %v674, %v676
        %v678 = vmul.f32 %v677, 0.03125
        %v679 = vmax.f32 %v678, 0.0
        %v680 = vadd.f32 %v679, 1e-05
        %v681 = vrsqrt.pop %v680
        %v682 = vmul.f32 %v671, %v681
        %v683 = vlaneseq
        %v684 = vshrl.u32 %v683, 7
        %v685 = vsub.s32 1, %v684
        %v686 = vrot.slane %v558, %v685
        %v687 = vmul.f32 %v682, %v686
        %v688 = vlaneseq
        %v689 = vshrl.u32 %v688, 7
        %v690 = vsub.s32 2, %v689
        %v691 = vrot.slane %v558, %v690
        %v692 = vadd.f32 %v687, %v691
        %v693 = vmul.f32 %v692, 0.2
        %v694 = vmax.f32 %v692, %v693
        %v695 = vld [vmem:[%s6] sm:$0xff]
        %v696 = vpack.c.bf16 %v694, %v694
        %v697 = vld [vmem:[#allocation10] sm:$0xf]
        %v698 = vld [vmem:[#allocation10 + $0x4] sm:$0xf]
        %v699 = vld [vmem:[#allocation10 + $0x8] sm:$0xf]
        %v700 = vld [vmem:[#allocation10 + $0xc] sm:$0xf]
        %v701 = vld [vmem:[#allocation10 + $0x10] sm:$0xf]
        %v702 = vld [vmem:[#allocation10 + $0x14] sm:$0xf]
        %v703 = vld [vmem:[#allocation10 + $0x18] sm:$0xf]
        %v704 = vld [vmem:[#allocation10 + $0x1c] sm:$0xf]
        %v705 = vld [vmem:[#allocation10 + $0x20] sm:$0xf]
        %v706 = vld [vmem:[#allocation10 + $0x24] sm:$0xf]
        %v707 = vld [vmem:[#allocation10 + $0x28] sm:$0xf]
        %v708 = vld [vmem:[#allocation10 + $0x2c] sm:$0xf]
        %v709 = vld [vmem:[#allocation10 + $0x30] sm:$0xf]
        %v710 = vld [vmem:[#allocation10 + $0x34] sm:$0xf]
        %v711 = vld [vmem:[#allocation10 + $0x38] sm:$0xf]
        %v712 = vld [vmem:[#allocation10 + $0x3c] sm:$0xf]
        %v713 = vlaneseq
        %v714 = vshrl.u32 %v713, 7
        %v715 = vsub.s32 0, %v714
        %v716 = vrot.slane %v695, %v715
        %v733 = vunpack.c.l.b16 %v697
        %v734 = vunpack.c.l.b16 %v698
        %v735 = vunpack.c.l.b16 %v699
        %v736 = vunpack.c.l.b16 %v700
        %v737 = vunpack.c.l.b16 %v701
        %v738 = vunpack.c.l.b16 %v702
        %v739 = vunpack.c.l.b16 %v703
        %v740 = vunpack.c.l.b16 %v704
        %v741 = vunpack.c.l.b16 %v705
        %v742 = vunpack.c.l.b16 %v706
        %v743 = vunpack.c.l.b16 %v707
        %v744 = vunpack.c.l.b16 %v708
        %v745 = vunpack.c.l.b16 %v709
        %v746 = vunpack.c.l.b16 %v710
        %v747 = vunpack.c.l.b16 %v711
        %v748 = vunpack.c.l.b16 %v712
        %v749 = vpack.c.b16 %v734, %v733
        %v750 = vpack.c.b16 %v736, %v735
        %v751 = vpack.c.b16 %v738, %v737
        %v752 = vpack.c.b16 %v740, %v739
        %v753 = vpack.c.b16 %v742, %v741
        %v754 = vpack.c.b16 %v744, %v743
        %v755 = vpack.c.b16 %v746, %v745
        %v756 = vpack.c.b16 %v748, %v747
        %765 = vmatprep.subr.bf16.mxu0 0
        %766 = vmatpush1.bf16.msra.mxu0 %v749
        %767 = vmatprep.subr.bf16.mxu0 0
        %768 = vmatpush1.bf16.msra.mxu0 %v750
        %769 = vmatprep.subr.bf16.mxu0 0
        %770 = vmatpush1.bf16.msra.mxu0 %v751
        %771 = vmatprep.subr.bf16.mxu0 0
        %772 = vmatpush1.bf16.msra.mxu0 %v752
        %773 = vmatprep.subr.bf16.mxu0 0
        %774 = vmatpush1.bf16.msra.mxu0 %v753
        %775 = vmatprep.subr.bf16.mxu0 0
        %776 = vmatpush1.bf16.msra.mxu0 %v754
        %777 = vmatprep.subr.bf16.mxu0 0
        %778 = vmatpush1.bf16.msra.mxu0 %v755
        %779 = vmatprep.subr.bf16.mxu0 0
        %780 = vmatpush1.bf16.msra.mxu0 %v756
        %781 = vmatprep.subr.bf16.mxu0 0
        %782 = vmatpush1.bf16.msra.mxu0 0
        %783 = vmatprep.subr.bf16.mxu0 0
        %784 = vmatpush1.bf16.msra.mxu0 0
        %785 = vmatprep.subr.bf16.mxu0 0
        %786 = vmatpush1.bf16.msra.mxu0 0
        %787 = vmatprep.subr.bf16.mxu0 0
        %788 = vmatpush1.bf16.msra.mxu0 0
        %789 = vmatprep.subr.bf16.mxu0 0
        %790 = vmatpush1.bf16.msra.mxu0 0
        %791 = vmatprep.subr.bf16.mxu0 0
        %792 = vmatpush1.bf16.msra.mxu0 0
        %793 = vmatprep.subr.bf16.mxu0 0
        %794 = vmatpush1.bf16.msra.mxu0 0
        %795 = vmatprep.subr.bf16.mxu0 0
        %796 = vmatpush1.bf16.msra.mxu0 0
        %797 = vmatprep.mubr.bf16.mxu0 0
        %798 = vmatmul.mubr.bf16.gmra.mrb[0].mxu0 %v696
        %v799 = vpop.f32.mrb[0].mxu0
        %v800 = vadd.f32 %v716, %v799
        %v801 = vpop.f32.mrb[0].mxu0
        %v802 = vpop.f32.mrb[0].mxu0
        %v803 = vpop.f32.mrb[0].mxu0
        %804 = vdwg.mxu0
        %805 = vadd.xlane.f32.xlu0 %v800
        %v806 = vpop.xlane.xlu0 %805
        %v807 = vmul.f32 %v806, 0.03125
        %v808 = vsub.f32 %v800, %v807
        %v809 = vmul.f32 %v808, %v808
        %810 = vadd.xlane.f32.xlu0 %v809
        %v811 = vpop.xlane.xlu0 %810
        %v812 = vmul.f32 %v807, 96.0
        %v813 = vmul.f32 %v812, %v807
        %v814 = vsub.f32 %v811, %v813
        %v815 = vmul.f32 %v814, 0.03125
        %v816 = vmax.f32 %v815, 0.0
        %v817 = vadd.f32 %v816, 1e-05
        %v818 = vrsqrt.pop %v817
        %v819 = vmul.f32 %v808, %v818
        %v820 = vlaneseq
        %v821 = vshrl.u32 %v820, 7
        %v822 = vsub.s32 1, %v821
        %v823 = vrot.slane %v695, %v822
        %v824 = vmul.f32 %v819, %v823
        %v825 = vlaneseq
        %v826 = vshrl.u32 %v825, 7
        %v827 = vsub.s32 2, %v826
        %v828 = vrot.slane %v695, %v827
        %v829 = vadd.f32 %v824, %v828
        %v830 = vmul.f32 %v829, 0.2
        %v831 = vmax.f32 %v829, %v830
        %v832 = vld [vmem:[%s8] sm:$0xff]
        %v833 = vpack.c.bf16 %v831, %v831
        %v834 = vld [vmem:[#allocation11] sm:$0xf]
        %v835 = vld [vmem:[#allocation11 + $0x4] sm:$0xf]
        %v836 = vld [vmem:[#allocation11 + $0x8] sm:$0xf]
        %v837 = vld [vmem:[#allocation11 + $0xc] sm:$0xf]
        %v838 = vld [vmem:[#allocation11 + $0x10] sm:$0xf]
        %v839 = vld [vmem:[#allocation11 + $0x14] sm:$0xf]
        %v840 = vld [vmem:[#allocation11 + $0x18] sm:$0xf]
        %v841 = vld [vmem:[#allocation11 + $0x1c] sm:$0xf]
        %v842 = vld [vmem:[#allocation11 + $0x20] sm:$0xf]
        %v843 = vld [vmem:[#allocation11 + $0x24] sm:$0xf]
        %v844 = vld [vmem:[#allocation11 + $0x28] sm:$0xf]
        %v845 = vld [vmem:[#allocation11 + $0x2c] sm:$0xf]
        %v846 = vld [vmem:[#allocation11 + $0x30] sm:$0xf]
        %v847 = vld [vmem:[#allocation11 + $0x34] sm:$0xf]
        %v848 = vld [vmem:[#allocation11 + $0x38] sm:$0xf]
        %v849 = vld [vmem:[#allocation11 + $0x3c] sm:$0xf]
        %v850 = vlaneseq
        %v851 = vshrl.u32 %v850, 7
        %v852 = vsub.s32 0, %v851
        %v853 = vrot.slane %v832, %v852
        %v870 = vunpack.c.l.b16 %v834
        %v871 = vunpack.c.l.b16 %v835
        %v872 = vunpack.c.l.b16 %v836
        %v873 = vunpack.c.l.b16 %v837
        %v874 = vunpack.c.l.b16 %v838
        %v875 = vunpack.c.l.b16 %v839
        %v876 = vunpack.c.l.b16 %v840
        %v877 = vunpack.c.l.b16 %v841
        %v878 = vunpack.c.l.b16 %v842
        %v879 = vunpack.c.l.b16 %v843
        %v880 = vunpack.c.l.b16 %v844
        %v881 = vunpack.c.l.b16 %v845
        %v882 = vunpack.c.l.b16 %v846
        %v883 = vunpack.c.l.b16 %v847
        %v884 = vunpack.c.l.b16 %v848
        %v885 = vunpack.c.l.b16 %v849
        %v886 = vpack.c.b16 %v871, %v870
        %v887 = vpack.c.b16 %v873, %v872
        %v888 = vpack.c.b16 %v875, %v874
        %v889 = vpack.c.b16 %v877, %v876
        %v890 = vpack.c.b16 %v879, %v878
        %v891 = vpack.c.b16 %v881, %v880
        %v892 = vpack.c.b16 %v883, %v882
        %v893 = vpack.c.b16 %v885, %v884
        %902 = vmatprep.subr.bf16.mxu0 0
        %903 = vmatpush1.bf16.msra.mxu0 %v886
        %904 = vmatprep.subr.bf16.mxu0 0
        %905 = vmatpush1.bf16.msra.mxu0 %v887
        %906 = vmatprep.subr.bf16.mxu0 0
        %907 = vmatpush1.bf16.msra.mxu0 %v888
        %908 = vmatprep.subr.bf16.mxu0 0
        %909 = vmatpush1.bf16.msra.mxu0 %v889
        %910 = vmatprep.subr.bf16.mxu0 0
        %911 = vmatpush1.bf16.msra.mxu0 %v890
        %912 = vmatprep.subr.bf16.mxu0 0
        %913 = vmatpush1.bf16.msra.mxu0 %v891
        %914 = vmatprep.subr.bf16.mxu0 0
        %915 = vmatpush1.bf16.msra.mxu0 %v892
        %916 = vmatprep.subr.bf16.mxu0 0
        %917 = vmatpush1.bf16.msra.mxu0 %v893
        %918 = vmatprep.subr.bf16.mxu0 0
        %919 = vmatpush1.bf16.msra.mxu0 0
        %920 = vmatprep.subr.bf16.mxu0 0
        %921 = vmatpush1.bf16.msra.mxu0 0
        %922 = vmatprep.subr.bf16.mxu0 0
        %923 = vmatpush1.bf16.msra.mxu0 0
        %924 = vmatprep.subr.bf16.mxu0 0
        %925 = vmatpush1.bf16.msra.mxu0 0
        %926 = vmatprep.subr.bf16.mxu0 0
        %927 = vmatpush1.bf16.msra.mxu0 0
        %928 = vmatprep.subr.bf16.mxu0 0
        %929 = vmatpush1.bf16.msra.mxu0 0
        %930 = vmatprep.subr.bf16.mxu0 0
        %931 = vmatpush1.bf16.msra.mxu0 0
        %932 = vmatprep.subr.bf16.mxu0 0
        %933 = vmatpush1.bf16.msra.mxu0 0
        %934 = vmatprep.mubr.bf16.mxu0 0
        %935 = vmatmul.mubr.bf16.gmra.mrb[0].mxu0 %v833
        %v936 = vpop.f32.mrb[0].mxu0
        %v937 = vadd.f32 %v853, %v936
        %v938 = vpop.f32.mrb[0].mxu0
        %v939 = vpop.f32.mrb[0].mxu0
        %v940 = vpop.f32.mrb[0].mxu0
        %941 = vdwg.mxu0
        %942 = vst [vmem:[%s418] sm:$0xff] %v937
        %s943 = sand.u32 %s231, 1
        %s944 = scalar_lea.sflag [#allocation4], %s943
        %s945 = sand.u32 %s231, 1
        %s946 = smul.addr %s945, 8
        %s947 = scalar_lea.vmem [#allocation13], %s946
        // Predicated region
        $region81: #{tpu_custom_call.1} parent=55 // pred_check
          %p948 = pneg %p241
        $region82: #{tpu_custom_call.1} parent=55 // pred_check_branch
          %950 = sbr.rel (%p948) target = $region84
        $region83: #{tpu_custom_call.1} parent=55 // pred_region
          %s952 = ssub.s32 128, 128
          %953 = vsyncadd %s944, %s952
          %s954 = smul.addr %s29, 128
          %s955 = scalar_lea.hbm %s9, %s954
          %s957 = sshll.u32 %s947, 4
          %s958 = int_to_ptr.vmem [resolvable:$true] %s957
          %960 = dma.vmem_to_hbm [thread:$0]  %s958, 128, %s955, %s944
        $region84: #{tpu_custom_call.1} parent=55 // pred_fallthru
          _
      $region56: #{tpu_custom_call.1} parent=5 // pred_fallthru
        _
      %p961 = scmp.le.s32.totalorder 2, %s24
      // Predicated region
      $region85: #{tpu_custom_call.1} parent=5 // pred_check
        %p962 = pneg %p961
      $region86: #{tpu_custom_call.1} parent=5 // pred_check_branch
        %964 = sbr.rel (%p962) target = $region88
      $region87: #{tpu_custom_call.1} parent=5 // pred_region
        %s965 = ssub.s32 %s24, 2
        // Predicated region
        $region89: #{tpu_custom_call.1} parent=87 // pred_check
          %p966 = pneg %p247
        $region90: #{tpu_custom_call.1} parent=87 // pred_check_branch
          %968 = sbr.rel (%p966) target = $region92
        $region91: #{tpu_custom_call.1} parent=87 // pred_region
          %s969 = sand.u32 %s232, 1
          %s970 = scalar_lea.sflag [#allocation4], %s969
          %s971 = sand.u32 %s232, 1
          %s972 = smul.addr %s971, 8
          %s973 = scalar_lea.vmem [#allocation13], %s972
          %974 = dma.done %s970, 128
        $region92: #{tpu_custom_call.1} parent=87 // pred_fallthru
          _
      $region88: #{tpu_custom_call.1} parent=5 // pred_fallthru
        _
    $region6: #{tpu_custom_call.1} parent=1 // loop_footer
      %s28 = sadd.s32 1, %s24
    $region7: #{tpu_custom_call.1} parent=1 // loop_footer_branch
      %23 = sbr.rel target = $region3
    $region8: #{tpu_custom_call.1} parent=1 // loop_exit
      _
    %975 = vsyncpa [#allocation3], 1
    %s976 = scalar_lea.sflag [#allocation3], 1
    %977 = vsyncpa %s976, 1
    %978 = vsyncpa [#allocation6], 1
    %979 = vsyncpa [#allocation9], 1
    %980 = vsyncpa [#allocation12], 1
    %981 = vsyncpa [#allocation4], 1
    %s982 = scalar_lea.sflag [#allocation4], 1
    %983 = vsyncpa %s982, 1

</llo_original>
